<compile_context>
chip_gen: v5e
topology: v5e:2x2
jax: 0.10.0
libtpu: 0.0.40
codegen_flags: <defaults>
</compile_context>

<pallas_src>
import math
import functools

import jax
import jax.numpy as jnp
from jax import lax
from jax.experimental import pallas as pl
from jax.experimental.pallas import tpu as pltpu


def _attention_kernel(*refs, scale, n_k, tk, has_mask, return_weights):
    it = iter(refs)
    q_ref = next(it)
    k_ref = next(it)
    v_ref = next(it)
    mask_ref = next(it) if has_mask else None
    ctx_ref = next(it)
    w_ref = next(it) if return_weights else None
    q_sc = next(it)
    m_sc = next(it)
    l_sc = next(it)
    acc_sc = next(it)
    m_hist = next(it) if return_weights else None

    ki = pl.program_id(2)

    @pl.when(ki == 0)
    def _init():
        # scale q once per (b, qi) tile (q block is resident across the key
        # axis) instead of once per key tile.
        q_sc[...] = (q_ref[...].astype(jnp.float32) * scale).astype(q_sc.dtype)
        m_sc[...] = jnp.full_like(m_sc, -jnp.inf)
        l_sc[...] = jnp.zeros_like(l_sc)
        acc_sc[...] = jnp.zeros_like(acc_sc)

    # scores tile (TQ, TK): native-dtype MXU operands, f32 accumulation.
    s = lax.dot_general(q_sc[...], k_ref[...], (((1,), (1,)), ((), ())),
                        preferred_element_type=jnp.float32)
    if has_mask:
        m = mask_ref[...]
        if m.dtype != jnp.bool_:
            m = m != 0                      # native-dtype mask compared in-kernel
        s = jnp.where(m, s, -1e9)

    # flash-style online softmax with f32 accumulators in VMEM scratch.
    m_prev = m_sc[...]
    m_new = jnp.maximum(m_prev, jnp.max(s, axis=-1, keepdims=True))
    alpha = jnp.exp(m_prev - m_new)
    p = jnp.exp(s - m_new)                  # (TQ, TK), f32, unnormalized

    l_sc[...] = alpha * l_sc[...] + jnp.sum(p, axis=-1, keepdims=True)
    acc_sc[...] = alpha * acc_sc[...] + jnp.dot(
        p.astype(v_ref.dtype), v_ref[...], preferred_element_type=jnp.float32)
    m_sc[...] = m_new

    if return_weights:
        # stream the unnormalized tile directly into the resident weights row
        # block (no O(TQ*Lk) f32 history scratch); keep only the running max
        # this tile was taken against for the final in-place rescale.
        m_hist[ki] = m_new
        if n_k == 1:
            w_ref[...] = p.astype(w_ref.dtype)
        else:
            off = pl.multiple_of(ki * tk, tk)          # tk % 128 == 0 when n_k > 1
            w_ref[:, pl.ds(off, tk)] = p.astype(w_ref.dtype)

    @pl.when(ki == n_k - 1)
    def _finalize():
        inv_l = 1.0 / l_sc[...]             # exact divide: weight rows sum to 1
        ctx_ref[...] = (acc_sc[...] * inv_l).astype(ctx_ref.dtype)
        if return_weights:
            m_fin = m_sc[...]
            if n_k == 1:
                corr = jnp.exp(m_hist[0] - m_fin) * inv_l
                w_ref[...] = (w_ref[...].astype(jnp.float32) * corr).astype(w_ref.dtype)
            else:
                def body(j, carry):
                    off = pl.multiple_of(j * tk, tk)
                    corr = jnp.exp(m_hist[j] - m_fin) * inv_l
                    chunk = w_ref[:, pl.ds(off, tk)].astype(jnp.float32)
                    w_ref[:, pl.ds(off, tk)] = (chunk * corr).astype(w_ref.dtype)
                    return carry
                lax.fori_loop(0, n_k, body, 0)


def _vmem_capacity_bytes():
    try:
        info = pltpu.get_tpu_info()
        cap = getattr(info, "vmem_capacity_bytes", None)
        if cap:
            return int(cap)
    except Exception:
        pass
    return 64 * 1024 * 1024  # conservative (v7x per-TensorCore VMEM)


def _footprint_bytes(tq, tk, n_k, Lk, H, Dv, q_item, k_item, v_item,
                     mask_item, out_item, has_mask, return_weights):
    fp = 2 * tq * H * q_item                 # q tile (double-buffered)
    fp += 2 * tk * H * k_item                # k tile
    fp += 2 * tk * Dv * v_item               # v tile
    if has_mask:
        fp += 2 * tq * tk * mask_item        # mask tile, native dtype
    fp += 2 * tq * Dv * out_item             # ctx block
    fp += tq * H * q_item                    # scaled-q scratch
    fp += 2 * tq * 4 + tq * Dv * 4           # m, l, acc f32 scratch
    if return_weights:
        fp += 2 * tq * Lk * out_item         # resident full-width weights block
        fp += n_k * tq * 4                   # per-tile running-max history
    return int(fp)


def _select_tiles(B, Lq, Lk, H, Dv, q_item, k_item, v_item, mask_item,
                  out_item, has_mask, return_weights, capacity,
                  tile_q=None, tile_k=None):
    kind = ""
    try:
        kind = jax.devices()[0].device_kind.lower()
    except Exception:
        pass
    is_v5e = any(t in kind for t in ("v5e", "v5 lite", "v5lite"))
    tq_opts = (128,) if is_v5e else (256, 128)
    tk_opts = (256, 128) if is_v5e else (512, 256, 128)

    tq_cands = [c for c in tq_opts if c <= Lq and Lq % c == 0] or [Lq]
    tk_cands = [c for c in tk_opts if c <= Lk and Lk % c == 0] or [Lk]
    if B == 1 and len(tq_cands) > 1:
        # keep >= 2 query tiles so both v7x TensorCores get parallel work
        multi = [c for c in tq_cands if Lq // c >= 2]
        if multi:
            tq_cands = multi
    if tile_q is not None:
        tq_cands = [tile_q]
    if tile_k is not None:
        tk_cands = [tile_k]

    budget = 0.6 * capacity
    best = None
    # prefer wide key tiles (lane-dense stores, deep pipeline); shrink TQ
    # before TK when VMEM-bound (v7x / long Lk with the dense weights output).
    for tk in tk_cands:
        for tq in tq_cands:
            n_k = (Lk + tk - 1) // tk
            fp = _footprint_bytes(tq, tk, n_k, Lk, H, Dv, q_item, k_item,
                                  v_item, mask_item, out_item, has_mask,
                                  return_weights)
            if fp <= budget:
                return tq, tk, fp
            if best is None or fp < best[2]:
                best = (tq, tk, fp)
    return best


def attention(query, keys, values, mask=None, *, return_weights=True,
              tile_q=None, tile_k=None):
    """Pallas equivalent of Attention.forward(query, keys, values, mask)."""
    B, Lq, H = query.shape
    Bk, Lk, Hk = keys.shape
    Bv, Lkv, Dv = values.shape
    assert (B, H) == (Bk, Hk) and (Bk, Lk) == (Bv, Lkv)
    if mask is not None:
        assert mask.shape == (B, Lq, Lk)

    scale = 1.0 / math.sqrt(H)
    has_mask = mask is not None

    q_item = jnp.dtype(query.dtype).itemsize
    k_item = jnp.dtype(keys.dtype).itemsize
    v_item = jnp.dtype(values.dtype).itemsize
    mask_item = jnp.dtype(mask.dtype).itemsize if has_mask else 0
    out_item = q_item

    capacity = _vmem_capacity_bytes()
    TQ, TK, fp = _select_tiles(B, Lq, Lk, H, Dv, q_item, k_item, v_item,
                               mask_item, out_item, has_mask, return_weights,
                               capacity, tile_q, tile_k)
    assert Lq % TQ == 0 and Lk % TK == 0
    n_q, n_k = Lq // TQ, Lk // TK

    # VMEM limit derived from the actual footprint (with slack), not hard-coded.
    vmem_limit = int(min(0.92 * capacity, max(32 * 1024 * 1024, 1.35 * fp)))
    vmem_limit = max(vmem_limit, fp + (2 << 20))
    vmem_limit = int(min(vmem_limit, capacity))

    kernel = functools.partial(_attention_kernel, scale=scale, n_k=n_k,
                               tk=TK, has_mask=has_mask,
                               return_weights=return_weights)

    in_specs = [
        pl.BlockSpec((None, TQ, H), lambda b, qi, ki: (b, qi, 0)),
        pl.BlockSpec((None, TK, H), lambda b, qi, ki: (b, ki, 0)),
        pl.BlockSpec((None, TK, Dv), lambda b, qi, ki: (b, ki, 0)),
    ]
    args = [query, keys, values]
    if has_mask:
        in_specs.append(
            pl.BlockSpec((None, TQ, TK), lambda b, qi, ki: (b, qi, ki)))
        args.append(mask)  # native dtype; compared against 0 in-kernel

    out_specs = [
        # context tile, resident across the key-reduction axis
        pl.BlockSpec((None, TQ, Dv), lambda b, qi, ki: (b, qi, 0)),
    ]
    out_shape = [jax.ShapeDtypeStruct((B, Lq, Dv), query.dtype)]
    if return_weights:
        # full-width weights row block, resident across the key-reduction axis
        out_specs.append(pl.BlockSpec((None, TQ, Lk), lambda b, qi, ki: (b, qi, 0)))
        out_shape.append(jax.ShapeDtypeStruct((B, Lq, Lk), query.dtype))

    scratch_shapes = [
        pltpu.VMEM((TQ, H), query.dtype),          # scaled q
        pltpu.VMEM((TQ, 1), jnp.float32),          # running max
        pltpu.VMEM((TQ, 1), jnp.float32),          # running sum
        pltpu.VMEM((TQ, Dv), jnp.float32),         # context accumulator
    ]
    if return_weights:
        scratch_shapes.append(pltpu.VMEM((n_k, TQ, 1), jnp.float32))  # max history

    grid_spec = pltpu.PrefetchScalarGridSpec(
        num_scalar_prefetch=0,
        grid=(B, n_q, n_k),
        in_specs=in_specs,
        out_specs=out_specs,
        scratch_shapes=scratch_shapes,
    )

    bytes_accessed = (
        query.size * q_item + keys.size * k_item + values.size * v_item
        + (B * Lq * Lk * mask_item if has_mask else 0)
        + B * Lq * Dv * out_item
        + (B * Lq * Lk * out_item if return_weights else 0))
    cost = pl.CostEstimate(
        flops=2 * B * Lq * Lk * (H + Dv),
        transcendentals=B * Lq * Lk,
        bytes_accessed=bytes_accessed,
    )

    outs = pl.pallas_call(
        kernel,
        out_shape=out_shape,
        grid_spec=grid_spec,
        compiler_params=pltpu.CompilerParams(
            # batch/query axes shard across TensorCores (v7x megacore);
            # the key axis is the online-softmax reduction.
            dimension_semantics=("parallel", "parallel", "arbitrary"),
            vmem_limit_bytes=vmem_limit,
        ),
        cost_estimate=cost,
    )(*args)

    if return_weights:
        ctx, w = outs
        return ctx, w
    return outs[0]


def _reference(query, keys, values, mask, scale):
    scores = jnp.einsum("bqd,bkd->bqk", query, keys) * scale
    if mask is not None:
        scores = jnp.where(mask != 0, scores, -1e9)
    w = jax.nn.softmax(scores, axis=-1)
    ctx = jnp.einsum("bqk,bkd->bqd", w, values)
    return ctx, w


if __name__ == "__main__":
    B, Lq, Lk, H, Dv = 2, 8, 8, 32, 32
    key = jax.random.PRNGKey(0)
    kq, kk, kv = jax.random.split(key, 3)

    query = jax.random.normal(kq, (B, Lq, H), dtype=jnp.float32)
    keys = jax.random.normal(kk, (B, Lk, H), dtype=jnp.float32)
    values = jax.random.normal(kv, (B, Lk, Dv), dtype=jnp.float32)
    # deterministic mask: lower-triangular (causal-ish), passed in native f32
    mask = jnp.tril(jnp.ones((Lq, Lk), dtype=jnp.float32))[None].repeat(B, axis=0)

    scale = 1.0 / math.sqrt(H)

    # masked path
    ctx, w = attention(query, keys, values, mask)
    jax.block_until_ready((ctx, w))
    ctx_expect, w_expect = _reference(query, keys, values, mask, scale)
    assert ctx.shape == (B, Lq, Dv) and w.shape == (B, Lq, Lk)
    assert jnp.allclose(ctx, ctx_expect, atol=1e-2, rtol=1e-2)
    assert jnp.allclose(w, w_expect, atol=1e-2, rtol=1e-2)

    # mask-free path
    ctx2, w2 = attention(query, keys, values, None)
    jax.block_until_ready((ctx2, w2))
    ctx2_expect, w2_expect = _reference(query, keys, values, None, scale)
    assert jnp.allclose(ctx2, ctx2_expect, atol=1e-2, rtol=1e-2)
    assert jnp.allclose(w2, w2_expect, atol=1e-2, rtol=1e-2)

    # ctx-only variant (skips the dense O(Lq*Lk) weights writeback entirely)
    ctx3 = attention(query, keys, values, mask, return_weights=False)
    jax.block_until_ready(ctx3)
    assert jnp.allclose(ctx3, ctx_expect, atol=1e-2, rtol=1e-2)

    print("KERNEL_OK")
</pallas_src>

<mosaic_0001>
module attributes {stable_mosaic.version = 11 : i64} {
  func.func @_attention_kernel(%arg0: i32, %arg1: i32, %arg2: i32, %arg3: memref<1x8x32xf32, #tpu.memory_space<vmem>>, %arg4: memref<1x8x32xf32, #tpu.memory_space<vmem>>, %arg5: memref<1x8x32xf32, #tpu.memory_space<vmem>>, %arg6: memref<1x8x8xf32, #tpu.memory_space<vmem>>, %arg7: memref<1x8x32xf32, #tpu.memory_space<vmem>>, %arg8: memref<1x8x8xf32, #tpu.memory_space<vmem>>, %arg9: memref<8x32xf32, #tpu.memory_space<vmem>>, %arg10: memref<8x1xf32, #tpu.memory_space<vmem>>, %arg11: memref<8x1xf32, #tpu.memory_space<vmem>>, %arg12: memref<8x32xf32, #tpu.memory_space<vmem>>, %arg13: memref<1x8x1xf32, #tpu.memory_space<vmem>>) attributes {dimension_semantics = [#tpu.dimension_semantics<parallel>, #tpu.dimension_semantics<parallel>, #tpu.dimension_semantics<arbitrary>], iteration_bounds = array<i64: 2, 1, 1>, scalar_prefetch = 0 : i64, scratch_operands = 5 : i64, tpu.core_type = #tpu.core_type<tc>, window_params = [{transform_indices = @transform_0, window_bounds = array<i64: 1, 8, 32>}, {transform_indices = @transform_1, window_bounds = array<i64: 1, 8, 32>}, {transform_indices = @transform_2, window_bounds = array<i64: 1, 8, 32>}, {transform_indices = @transform_3, window_bounds = array<i64: 1, 8, 8>}, {transform_indices = @transform_4, window_bounds = array<i64: 1, 8, 32>}, {transform_indices = @transform_5, window_bounds = array<i64: 1, 8, 8>}]} {
    %c0_i32 = arith.constant 0 : i32
    %0 = arith.cmpi eq, %arg2, %c0_i32 : i32
    %1 = arith.extui %0 : i1 to i32
    %c0_i32_0 = arith.constant 0 : i32
    %2 = arith.cmpi ne, %1, %c0_i32_0 : i32
    scf.if %2 {
      %c0_35 = arith.constant 0 : index
      %c0_36 = arith.constant 0 : index
      %c0_37 = arith.constant 0 : index
      %47 = vector.load %arg3[%c0_35, %c0_36, %c0_37] : memref<1x8x32xf32, #tpu.memory_space<vmem>>, vector<1x8x32xf32>
      %48 = vector.shape_cast %47 : vector<1x8x32xf32> to vector<8x32xf32>
      %cst_38 = arith.constant 0.176776692 : f32
      %49 = vector.broadcast %cst_38 : f32 to vector<8x32xf32>
      %50 = arith.mulf %48, %49 : vector<8x32xf32>
      %c0_39 = arith.constant 0 : index
      %c0_40 = arith.constant 0 : index
      %51 = vector.load %arg9[%c0_39, %c0_40] : memref<8x32xf32, #tpu.memory_space<vmem>>, vector<8x32xf32>
      tpu.vector_store %arg9[%c0_39, %c0_40], %50 {strides = array<i32>} : memref<8x32xf32, #tpu.memory_space<vmem>>, vector<8x32xf32>,
      %cst_41 = arith.constant 0xFF800000 : f32
      %52 = vector.broadcast %cst_41 : f32 to vector<8x1xf32>
      %c0_42 = arith.constant 0 : index
      %c0_43 = arith.constant 0 : index
      %53 = vector.load %arg10[%c0_42, %c0_43] : memref<8x1xf32, #tpu.memory_space<vmem>>, vector<8x1xf32>
      tpu.vector_store %arg10[%c0_42, %c0_43], %52 {strides = array<i32>} : memref<8x1xf32, #tpu.memory_space<vmem>>, vector<8x1xf32>,
      %cst_44 = arith.constant 0.000000e+00 : f32
      %54 = vector.broadcast %cst_44 : f32 to vector<8x1xf32>
      %c0_45 = arith.constant 0 : index
      %c0_46 = arith.constant 0 : index
      %55 = vector.load %arg11[%c0_45, %c0_46] : memref<8x1xf32, #tpu.memory_space<vmem>>, vector<8x1xf32>
      tpu.vector_store %arg11[%c0_45, %c0_46], %54 {strides = array<i32>} : memref<8x1xf32, #tpu.memory_space<vmem>>, vector<8x1xf32>,
      %cst_47 = arith.constant 0.000000e+00 : f32
      %56 = vector.broadcast %cst_47 : f32 to vector<8x32xf32>
      %c0_48 = arith.constant 0 : index
      %c0_49 = arith.constant 0 : index
      %57 = vector.load %arg12[%c0_48, %c0_49] : memref<8x32xf32, #tpu.memory_space<vmem>>, vector<8x32xf32>
      tpu.vector_store %arg12[%c0_48, %c0_49], %56 {strides = array<i32>} : memref<8x32xf32, #tpu.memory_space<vmem>>, vector<8x32xf32>,
    } else {
    }
    %c0 = arith.constant 0 : index
    %c0_1 = arith.constant 0 : index
    %3 = vector.load %arg9[%c0, %c0_1] : memref<8x32xf32, #tpu.memory_space<vmem>>, vector<8x32xf32>
    %c0_2 = arith.constant 0 : index
    %c0_3 = arith.constant 0 : index
    %c0_4 = arith.constant 0 : index
    %4 = vector.load %arg4[%c0_2, %c0_3, %c0_4] : memref<1x8x32xf32, #tpu.memory_space<vmem>>, vector<1x8x32xf32>
    %5 = vector.shape_cast %4 : vector<1x8x32xf32> to vector<8x32xf32>
    %cst = arith.constant dense<0.000000e+00> : vector<8x8xf32>
    %6 = tpu.matmul %3, %5, %cst {dimension_numbers = #tpu.dot_dimension_numbers<[1], [1], [0], [0], [0, 0, 1, 0], [], []>} : vector<8x32xf32>, vector<8x32xf32>, vector<8x8xf32> -> vector<8x8xf32>
    %c0_5 = arith.constant 0 : index
    %c0_6 = arith.constant 0 : index
    %c0_7 = arith.constant 0 : index
    %7 = vector.load %arg6[%c0_5, %c0_6, %c0_7] : memref<1x8x8xf32, #tpu.memory_space<vmem>>, vector<1x8x8xf32>
    %8 = vector.shape_cast %7 : vector<1x8x8xf32> to vector<8x8xf32>
    %cst_8 = arith.constant 0.000000e+00 : f32
    %9 = vector.broadcast %cst_8 : f32 to vector<8x8xf32>
    %10 = arith.cmpf one, %8, %9 : vector<8x8xf32>
    %cst_9 = arith.constant -1.000000e+09 : f32
    %11 = vector.broadcast %cst_9 : f32 to vector<8x8xf32>
    %12 = arith.select %10, %6, %11 : vector<8x8xi1>, vector<8x8xf32>
    %c0_10 = arith.constant 0 : index
    %c0_11 = arith.constant 0 : index
    %13 = vector.load %arg10[%c0_10, %c0_11] : memref<8x1xf32, #tpu.memory_space<vmem>>, vector<8x1xf32>
    %cst_12 = arith.constant dense<0xFF800000> : vector<8xf32>
    %14 = vector.multi_reduction <maximumf>, %12, %cst_12 [1] : vector<8x8xf32> to vector<8xf32>
    %15 = vector.shape_cast %14 : vector<8xf32> to vector<8x1xf32>
    %16 = arith.maximumf %13, %15 : vector<8x1xf32>
    %17 = arith.subf %13, %16 : vector<8x1xf32>
    %18 = math.exp %17 : vector<8x1xf32>
    %19 = vector.broadcast %16 : vector<8x1xf32> to vector<8x8xf32>
    %20 = arith.subf %12, %19 : vector<8x8xf32>
    %21 = math.exp %20 : vector<8x8xf32>
    %c0_13 = arith.constant 0 : index
    %c0_14 = arith.constant 0 : index
    %22 = vector.load %arg11[%c0_13, %c0_14] : memref<8x1xf32, #tpu.memory_space<vmem>>, vector<8x1xf32>
    %23 = arith.mulf %18, %22 : vector<8x1xf32>
    %cst_15 = arith.constant dense<0.000000e+00> : vector<8xf32>
    %24 = vector.multi_reduction <add>, %21, %cst_15 [1] : vector<8x8xf32> to vector<8xf32>
    %25 = vector.shape_cast %24 : vector<8xf32> to vector<8x1xf32>
    %26 = arith.addf %23, %25 : vector<8x1xf32>
    %c0_16 = arith.constant 0 : index
    %c0_17 = arith.constant 0 : index
    %27 = vector.load %arg11[%c0_16, %c0_17] : memref<8x1xf32, #tpu.memory_space<vmem>>, vector<8x1xf32>
    tpu.vector_store %arg11[%c0_16, %c0_17], %26 {strides = array<i32>} : memref<8x1xf32, #tpu.memory_space<vmem>>, vector<8x1xf32>,
    %c0_18 = arith.constant 0 : index
    %c0_19 = arith.constant 0 : index
    %28 = vector.load %arg12[%c0_18, %c0_19] : memref<8x32xf32, #tpu.memory_space<vmem>>, vector<8x32xf32>
    %29 = vector.broadcast %18 : vector<8x1xf32> to vector<8x32xf32>
    %30 = arith.mulf %29, %28 : vector<8x32xf32>
    %c0_20 = arith.constant 0 : index
    %c0_21 = arith.constant 0 : index
    %c0_22 = arith.constant 0 : index
    %31 = vector.load %arg5[%c0_20, %c0_21, %c0_22] : memref<1x8x32xf32, #tpu.memory_space<vmem>>, vector<1x8x32xf32>
    %32 = vector.shape_cast %31 : vector<1x8x32xf32> to vector<8x32xf32>
    %cst_23 = arith.constant dense<0.000000e+00> : vector<8x32xf32>
    %33 = tpu.matmul %21, %32, %cst_23 {dimension_numbers = #tpu.dot_dimension_numbers<[1], [0], [0], [1], [0, 0, 1, 1], [], []>} : vector<8x8xf32>, vector<8x32xf32>, vector<8x32xf32> -> vector<8x32xf32>
    %34 = arith.addf %30, %33 : vector<8x32xf32>
    %c0_24 = arith.constant 0 : index
    %c0_25 = arith.constant 0 : index
    %35 = vector.load %arg12[%c0_24, %c0_25] : memref<8x32xf32, #tpu.memory_space<vmem>>, vector<8x32xf32>
    tpu.vector_store %arg12[%c0_24, %c0_25], %34 {strides = array<i32>} : memref<8x32xf32, #tpu.memory_space<vmem>>, vector<8x32xf32>,
    %c0_26 = arith.constant 0 : index
    %c0_27 = arith.constant 0 : index
    %36 = vector.load %arg10[%c0_26, %c0_27] : memref<8x1xf32, #tpu.memory_space<vmem>>, vector<8x1xf32>
    tpu.vector_store %arg10[%c0_26, %c0_27], %16 {strides = array<i32>} : memref<8x1xf32, #tpu.memory_space<vmem>>, vector<8x1xf32>,
    %37 = arith.index_cast %arg2 : i32 to index
    %c0_28 = arith.constant 0 : index
    %c0_29 = arith.constant 0 : index
    %38 = vector.load %arg13[%37, %c0_28, %c0_29] : memref<1x8x1xf32, #tpu.memory_space<vmem>>, vector<1x8x1xf32>
    %39 = vector.shape_cast %38 : vector<1x8x1xf32> to vector<8x1xf32>
    %40 = vector.shape_cast %16 : vector<8x1xf32> to vector<1x8x1xf32>
    tpu.vector_store %arg13[%37, %c0_28, %c0_29], %40 {strides = array<i32>} : memref<1x8x1xf32, #tpu.memory_space<vmem>>, vector<1x8x1xf32>,
    %c0_30 = arith.constant 0 : index
    %c0_31 = arith.constant 0 : index
    %c0_32 = arith.constant 0 : index
    %41 = vector.load %arg8[%c0_30, %c0_31, %c0_32] : memref<1x8x8xf32, #tpu.memory_space<vmem>>, vector<1x8x8xf32>
    %42 = vector.shape_cast %41 : vector<1x8x8xf32> to vector<8x8xf32>
    %43 = vector.shape_cast %21 : vector<8x8xf32> to vector<1x8x8xf32>
    tpu.vector_store %arg8[%c0_30, %c0_31, %c0_32], %43 {strides = array<i32>} : memref<1x8x8xf32, #tpu.memory_space<vmem>>, vector<1x8x8xf32>,
    %c0_i32_33 = arith.constant 0 : i32
    %44 = arith.cmpi eq, %arg2, %c0_i32_33 : i32
    %45 = arith.extui %44 : i1 to i32
    %c0_i32_34 = arith.constant 0 : i32
    %46 = arith.cmpi ne, %45, %c0_i32_34 : i32
    scf.if %46 {
      %c0_35 = arith.constant 0 : index
      %c0_36 = arith.constant 0 : index
      %47 = vector.load %arg11[%c0_35, %c0_36] : memref<8x1xf32, #tpu.memory_space<vmem>>, vector<8x1xf32>
      %cst_37 = arith.constant 1.000000e+00 : f32
      %48 = vector.broadcast %cst_37 : f32 to vector<8x1xf32>
      %49 = arith.divf %48, %47 : vector<8x1xf32>
      %c0_38 = arith.constant 0 : index
      %c0_39 = arith.constant 0 : index
      %50 = vector.load %arg12[%c0_38, %c0_39] : memref<8x32xf32, #tpu.memory_space<vmem>>, vector<8x32xf32>
      %51 = vector.broadcast %49 : vector<8x1xf32> to vector<8x32xf32>
      %52 = arith.mulf %50, %51 : vector<8x32xf32>
      %c0_40 = arith.constant 0 : index
      %c0_41 = arith.constant 0 : index
      %c0_42 = arith.constant 0 : index
      %53 = vector.load %arg7[%c0_40, %c0_41, %c0_42] : memref<1x8x32xf32, #tpu.memory_space<vmem>>, vector<1x8x32xf32>
      %54 = vector.shape_cast %53 : vector<1x8x32xf32> to vector<8x32xf32>
      %55 = vector.shape_cast %52 : vector<8x32xf32> to vector<1x8x32xf32>
      tpu.vector_store %arg7[%c0_40, %c0_41, %c0_42], %55 {strides = array<i32>} : memref<1x8x32xf32, #tpu.memory_space<vmem>>, vector<1x8x32xf32>,
      %c0_43 = arith.constant 0 : index
      %c0_44 = arith.constant 0 : index
      %56 = vector.load %arg10[%c0_43, %c0_44] : memref<8x1xf32, #tpu.memory_space<vmem>>, vector<8x1xf32>
      %c0_45 = arith.constant 0 : index
      %c0_46 = arith.constant 0 : index
      %c0_47 = arith.constant 0 : index
      %57 = vector.load %arg13[%c0_45, %c0_46, %c0_47] : memref<1x8x1xf32, #tpu.memory_space<vmem>>, vector<1x8x1xf32>
      %58 = vector.shape_cast %57 : vector<1x8x1xf32> to vector<8x1xf32>
      %59 = arith.subf %58, %56 : vector<8x1xf32>
      %60 = math.exp %59 : vector<8x1xf32>
      %61 = arith.mulf %60, %49 : vector<8x1xf32>
      %c0_48 = arith.constant 0 : index
      %c0_49 = arith.constant 0 : index
      %c0_50 = arith.constant 0 : index
      %62 = vector.load %arg8[%c0_48, %c0_49, %c0_50] : memref<1x8x8xf32, #tpu.memory_space<vmem>>, vector<1x8x8xf32>
      %63 = vector.shape_cast %62 : vector<1x8x8xf32> to vector<8x8xf32>
      %64 = vector.broadcast %61 : vector<8x1xf32> to vector<8x8xf32>
      %65 = arith.mulf %63, %64 : vector<8x8xf32>
      %c0_51 = arith.constant 0 : index
      %c0_52 = arith.constant 0 : index
      %c0_53 = arith.constant 0 : index
      %66 = vector.load %arg8[%c0_51, %c0_52, %c0_53] : memref<1x8x8xf32, #tpu.memory_space<vmem>>, vector<1x8x8xf32>
      %67 = vector.shape_cast %66 : vector<1x8x8xf32> to vector<8x8xf32>
      %68 = vector.shape_cast %65 : vector<8x8xf32> to vector<1x8x8xf32>
      tpu.vector_store %arg8[%c0_51, %c0_52, %c0_53], %68 {strides = array<i32>} : memref<1x8x8xf32, #tpu.memory_space<vmem>>, vector<1x8x8xf32>,
    } else {
    }
    return
  }
  func.func @transform_0(%arg0: i32, %arg1: i32, %arg2: i32) -> (i32, i32, i32) {
    %c0_i32 = arith.constant 0 : i32
    %c0_i32_0 = arith.constant 0 : i32
    return %arg0, %arg1, %c0_i32 : i32, i32, i32
  }
  func.func @transform_1(%arg0: i32, %arg1: i32, %arg2: i32) -> (i32, i32, i32) {
    %c0_i32 = arith.constant 0 : i32
    %c0_i32_0 = arith.constant 0 : i32
    return %arg0, %arg2, %c0_i32 : i32, i32, i32
  }
  func.func @transform_2(%arg0: i32, %arg1: i32, %arg2: i32) -> (i32, i32, i32) {
    %c0_i32 = arith.constant 0 : i32
    %c0_i32_0 = arith.constant 0 : i32
    return %arg0, %arg2, %c0_i32 : i32, i32, i32
  }
  func.func @transform_3(%arg0: i32, %arg1: i32, %arg2: i32) -> (i32, i32, i32) {
    %c0_i32 = arith.constant 0 : i32
    return %arg0, %arg1, %arg2 : i32, i32, i32
  }
  func.func @transform_4(%arg0: i32, %arg1: i32, %arg2: i32) -> (i32, i32, i32) {
    %c0_i32 = arith.constant 0 : i32
    %c0_i32_0 = arith.constant 0 : i32
    return %arg0, %arg1, %c0_i32 : i32, i32, i32
  }
  func.func @transform_5(%arg0: i32, %arg1: i32, %arg2: i32) -> (i32, i32, i32) {
    %c0_i32 = arith.constant 0 : i32
    %c0_i32_0 = arith.constant 0 : i32
    return %arg0, %arg1, %c0_i32 : i32, i32, i32
  }
}

</mosaic_0001>

<llo_original>
// kernel: tpu_custom_call.1
$region0: #{tpu_custom_call.1}
  #allocation0 [shape = 'u32[]', space=smem, size = 0x4, offset = 0x4, fixed_abs, tag = 'smem constant byte address 0x4 - core index']
  #allocation1 [shape = 'u32[72,128]{1,0:T(1,128)}', space=vmem, size = 0x9000, scoped, tag = 'internal scratch']
  #allocation2 [shape = 'f32[8,32]{1,0:T(8,128)}', space=vmem, size = 0x1000, scoped, tag = 'scratch operand']
  #allocation3 [shape = 'f32[8,1]{1,0:T(8,128)}', space=vmem, size = 0x1000, scoped, tag = 'scratch operand']
  #allocation4 [shape = 'f32[8,1]{1,0:T(8,128)}', space=vmem, size = 0x1000, scoped, tag = 'scratch operand']
  #allocation5 [shape = 'f32[8,32]{1,0:T(8,128)}', space=vmem, size = 0x1000, scoped, tag = 'scratch operand']
  #allocation6 [shape = 'f32[1,8,1]{2,1,0:T(8,128)}', space=vmem, size = 0x1000, scoped, tag = 'scratch operand']
  %s0 = inlined_call_operand.hbm [shape: f32[2,8,32], index: 0, kind: input, shape index: {}]
  %s1 = inlined_call_operand.hbm [shape: f32[2,8,32], index: 1, kind: input, shape index: {}]
  %s2 = inlined_call_operand.hbm [shape: f32[2,8,32], index: 2, kind: input, shape index: {}]
  %s3 = inlined_call_operand.hbm [shape: f32[2,8,8], index: 3, kind: input, shape index: {}]
  %s4 = inlined_call_operand.hbm [shape: f32[2,8,32], index: 4, kind: output, shape index: {0}]
  %s5 = inlined_call_operand.hbm [shape: f32[2,8,8], index: 5, kind: output, shape index: {1}]
  %6 = xla_tuple %s4, %s5
  %s7 = sld [smem:[#allocation0]]
  $region81: #{tpu_custom_call.1} parent=0
    _
  %s9 = ssub.s32 1, %s7
  %s10 = scalar_select 0, %s9, %s7
  $region1: #{tpu_custom_call.1} parent=0
    #allocation7 [shape = 'u8[8192]{0}', space=vmem, size = 0x2000, scoped, tag = 'input window, operand 0']
    #allocation8 [shape = 's32[2]{0}', space=sflag, size = 0x8, scoped, tag = 'scoped memory for tpu_custom_call.1']
    #allocation9 [shape = 's32[2]{0}', space=sflag, size = 0x8, scoped, tag = 'scoped memory for tpu_custom_call.1']
    #allocation10 [shape = 'u8[8192]{0}', space=vmem, size = 0x2000, scoped, tag = 'input window, operand 1']
    #allocation11 [shape = 's32[2]{0}', space=sflag, size = 0x8, scoped, tag = 'scoped memory for tpu_custom_call.1']
    #allocation12 [shape = 'u8[8192]{0}', space=vmem, size = 0x2000, scoped, tag = 'input window, operand 2']
    #allocation13 [shape = 'u8[8192]{0}', space=vmem, size = 0x2000, scoped, tag = 'input window, operand 3']
    #allocation14 [shape = 's32[2]{0}', space=sflag, size = 0x8, scoped, tag = 'scoped memory for tpu_custom_call.1']
    #allocation15 [shape = 'u8[8192]{0}', space=vmem, size = 0x2000, scoped, tag = 'output window, operand 0']
    #allocation16 [shape = 'u8[8192]{0}', space=vmem, size = 0x2000, scoped, tag = 'output window, operand 1']
    #allocation17 [shape = 's32[2]{0}', space=sflag, size = 0x8, scoped, tag = 'scoped memory for tpu_custom_call.1']
    %11 = vsyncpa [#allocation8], 0
    %s12 = scalar_lea.sflag [#allocation8], 1
    %13 = vsyncpa %s12, 0
    %14 = vsyncpa [#allocation11], 0
    %s15 = scalar_lea.sflag [#allocation11], 1
    %16 = vsyncpa %s15, 0
    %17 = vsyncpa [#allocation14], 0
    %s18 = scalar_lea.sflag [#allocation14], 1
    %19 = vsyncpa %s18, 0
    %20 = vsyncpa [#allocation9], 0
    %s21 = scalar_lea.sflag [#allocation9], 1
    %22 = vsyncpa %s21, 0
    %23 = vsyncpa [#allocation17], 0
    %s24 = scalar_lea.sflag [#allocation17], 1
    %25 = vsyncpa %s24, 0
    loop: start=0, step=1, limit=4
    $region2: #{tpu_custom_call.1} parent=1 // loop_pre_header
      _
    $region3: #{tpu_custom_call.1} parent=1 // loop_header
      %s27 = sphi 0, %s31
      %p28 = scmp.ge.s32.totalorder %s27, 4
      %s34 = sphi 0, %s53
      %s35 = sphi 0, %s49
      %s36 = sphi 0, %s45
      %s37 = sphi 0, %s34
      %s38 = sphi 0, %s35
      %s39 = sphi 0, %s36
      %s40 = sphi 0, %s37
      %s41 = sphi 0, %s38
      %s42 = sphi 0, %s39
      %s58 = sphi 0, %s60
      %s61 = sphi 0, %s58
      %s62 = sphi 0, %s61
      %s78 = sphi 0, %s62
      %s86 = sphi 0, %s88
      %s89 = sphi 0, %s86
      %s90 = sphi 0, %s89
      %s106 = sphi 0, %s90
      %s114 = sphi 0, %s116
      %s117 = sphi 0, %s114
      %s118 = sphi 0, %s117
      %s134 = sphi 0, %s118
      %s144 = sphi 0, %s146
      %s147 = sphi 0, %s144
      %s148 = sphi 0, %s147
      %s164 = sphi 0, %s148
      %s172 = sphi 0, %s174
      %s175 = sphi 0, %s172
      %s176 = sphi 0, %s175
      %s192 = sphi 0, %s176
      %s200 = sphi 0, %s202
      %s203 = sphi 0, %s200
      %s204 = sphi 0, %s203
      %s220 = sphi 0, %s204
    $region4: #{tpu_custom_call.1} parent=1 // loop_header_branch
      %30 = sbr.rel (%p28) target = $region8
    $region5: #{tpu_custom_call.1} parent=1 // loop_body
      %s32 = ssub.s32 %s27, 1
      %s33 = ssub.s32 %s27, 2
      %s43 = sadd.s32 1, %s36
      %p44 = scmp.ge.s32.totalorder %s43, 1
      %s45 = scalar_select %p44, 0, %s43
      %s46 = sadd.s32 1, %s35
      %s47 = scalar_select %p44, %s46, %s35
      %p48 = scmp.ge.s32.totalorder %s47, 1
      %s49 = scalar_select %p48, 0, %s47
      %s50 = sadd.s32 1, %s34
      %s51 = scalar_select %p48, %s50, %s34
      %p52 = scmp.ge.s32.totalorder %s51, 2
      %s53 = scalar_select %p52, 0, %s51
      %s54 = ssub.s32 %s34, %s53
      %s55 = ssub.s32 %s35, %s49
      %s56 = sor.u32 %s54, %s55
      %p57 = scmp.eq.s32.totalorder %s56, 0
      %s59 = sadd.s32 %s58, 1
      %s60 = scalar_select %p57, %s58, %s59
      %p63 = pneg %p57
      %p64 = scmp.eq.s32.totalorder %s27, 1
      %p65 = por %p63, %p64
      %p66 = scmp.ne.s32.totalorder %s58, %s61
      %p67 = scmp.eq.s32.totalorder %s27, 0
      %p68 = por %p66, %p67
      %p69 = scmp.ne.s32.totalorder %s58, %s61
      %p70 = scmp.eq.s32.totalorder %s32, 1
      %p71 = por %p69, %p70
      %p72 = scmp.ne.s32.totalorder %s61, %s62
      %p73 = scmp.eq.s32.totalorder %s32, 0
      %p74 = por %p72, %p73
      %p75 = scmp.ne.s32.totalorder %s61, %s62
      %p76 = scmp.eq.s32.totalorder %s33, 1
      %p77 = por %p75, %p76
      %p79 = scmp.ne.s32.totalorder %s62, %s78
      %p80 = scmp.eq.s32.totalorder %s33, 0
      %p81 = por %p79, %p80
      %s82 = ssub.s32 %s34, %s53
      %s83 = ssub.s32 %s36, %s45
      %s84 = sor.u32 %s82, %s83
      %p85 = scmp.eq.s32.totalorder %s84, 0
      %s87 = sadd.s32 %s86, 1
      %s88 = scalar_select %p85, %s86, %s87
      %p91 = pneg %p85
      %p92 = scmp.eq.s32.totalorder %s27, 1
      %p93 = por %p91, %p92
      %p94 = scmp.ne.s32.totalorder %s86, %s89
      %p95 = scmp.eq.s32.totalorder %s27, 0
      %p96 = por %p94, %p95
      %p97 = scmp.ne.s32.totalorder %s86, %s89
      %p98 = scmp.eq.s32.totalorder %s32, 1
      %p99 = por %p97, %p98
      %p100 = scmp.ne.s32.totalorder %s89, %s90
      %p101 = scmp.eq.s32.totalorder %s32, 0
      %p102 = por %p100, %p101
      %p103 = scmp.ne.s32.totalorder %s89, %s90
      %p104 = scmp.eq.s32.totalorder %s33, 1
      %p105 = por %p103, %p104
      %p107 = scmp.ne.s32.totalorder %s90, %s106
      %p108 = scmp.eq.s32.totalorder %s33, 0
      %p109 = por %p107, %p108
      %s110 = ssub.s32 %s34, %s53
      %s111 = ssub.s32 %s36, %s45
      %s112 = sor.u32 %s110, %s111
      %p113 = scmp.eq.s32.totalorder %s112, 0
      %s115 = sadd.s32 %s114, 1
      %s116 = scalar_select %p113, %s114, %s115
      %p119 = pneg %p113
      %p120 = scmp.eq.s32.totalorder %s27, 1
      %p121 = por %p119, %p120
      %p122 = scmp.ne.s32.totalorder %s114, %s117
      %p123 = scmp.eq.s32.totalorder %s27, 0
      %p124 = por %p122, %p123
      %p125 = scmp.ne.s32.totalorder %s114, %s117
      %p126 = scmp.eq.s32.totalorder %s32, 1
      %p127 = por %p125, %p126
      %p128 = scmp.ne.s32.totalorder %s117, %s118
      %p129 = scmp.eq.s32.totalorder %s32, 0
      %p130 = por %p128, %p129
      %p131 = scmp.ne.s32.totalorder %s117, %s118
      %p132 = scmp.eq.s32.totalorder %s33, 1
      %p133 = por %p131, %p132
      %p135 = scmp.ne.s32.totalorder %s118, %s134
      %p136 = scmp.eq.s32.totalorder %s33, 0
      %p137 = por %p135, %p136
      %s138 = ssub.s32 %s34, %s53
      %s139 = ssub.s32 %s35, %s49
      %s140 = sor.u32 %s138, %s139
      %s141 = ssub.s32 %s36, %s45
      %s142 = sor.u32 %s140, %s141
      %p143 = scmp.eq.s32.totalorder %s142, 0
      %s145 = sadd.s32 %s144, 1
      %s146 = scalar_select %p143, %s144, %s145
      %p149 = pneg %p143
      %p150 = scmp.eq.s32.totalorder %s27, 1
      %p151 = por %p149, %p150
      %p152 = scmp.ne.s32.totalorder %s144, %s147
      %p153 = scmp.eq.s32.totalorder %s27, 0
      %p154 = por %p152, %p153
      %p155 = scmp.ne.s32.totalorder %s144, %s147
      %p156 = scmp.eq.s32.totalorder %s32, 1
      %p157 = por %p155, %p156
      %p158 = scmp.ne.s32.totalorder %s147, %s148
      %p159 = scmp.eq.s32.totalorder %s32, 0
      %p160 = por %p158, %p159
      %p161 = scmp.ne.s32.totalorder %s147, %s148
      %p162 = scmp.eq.s32.totalorder %s33, 1
      %p163 = por %p161, %p162
      %p165 = scmp.ne.s32.totalorder %s148, %s164
      %p166 = scmp.eq.s32.totalorder %s33, 0
      %p167 = por %p165, %p166
      %s168 = ssub.s32 %s34, %s53
      %s169 = ssub.s32 %s35, %s49
      %s170 = sor.u32 %s168, %s169
      %p171 = scmp.eq.s32.totalorder %s170, 0
      %s173 = sadd.s32 %s172, 1
      %s174 = scalar_select %p171, %s172, %s173
      %p177 = pneg %p171
      %p178 = scmp.eq.s32.totalorder %s27, 1
      %p179 = por %p177, %p178
      %p180 = scmp.ne.s32.totalorder %s172, %s175
      %p181 = scmp.eq.s32.totalorder %s27, 0
      %p182 = por %p180, %p181
      %p183 = scmp.ne.s32.totalorder %s172, %s175
      %p184 = scmp.eq.s32.totalorder %s32, 1
      %p185 = por %p183, %p184
      %p186 = scmp.ne.s32.totalorder %s175, %s176
      %p187 = scmp.eq.s32.totalorder %s32, 0
      %p188 = por %p186, %p187
      %p189 = scmp.ne.s32.totalorder %s175, %s176
      %p190 = scmp.eq.s32.totalorder %s33, 1
      %p191 = por %p189, %p190
      %p193 = scmp.ne.s32.totalorder %s176, %s192
      %p194 = scmp.eq.s32.totalorder %s33, 0
      %p195 = por %p193, %p194
      %s196 = ssub.s32 %s34, %s53
      %s197 = ssub.s32 %s35, %s49
      %s198 = sor.u32 %s196, %s197
      %p199 = scmp.eq.s32.totalorder %s198, 0
      %s201 = sadd.s32 %s200, 1
      %s202 = scalar_select %p199, %s200, %s201
      %p205 = pneg %p199
      %p206 = scmp.eq.s32.totalorder %s27, 1
      %p207 = por %p205, %p206
      %p208 = scmp.ne.s32.totalorder %s200, %s203
      %p209 = scmp.eq.s32.totalorder %s27, 0
      %p210 = por %p208, %p209
      %p211 = scmp.ne.s32.totalorder %s200, %s203
      %p212 = scmp.eq.s32.totalorder %s32, 1
      %p213 = por %p211, %p212
      %p214 = scmp.ne.s32.totalorder %s203, %s204
      %p215 = scmp.eq.s32.totalorder %s32, 0
      %p216 = por %p214, %p215
      %p217 = scmp.ne.s32.totalorder %s203, %s204
      %p218 = scmp.eq.s32.totalorder %s33, 1
      %p219 = por %p217, %p218
      %p221 = scmp.ne.s32.totalorder %s204, %s220
      %p222 = scmp.eq.s32.totalorder %s33, 0
      %p223 = por %p221, %p222
      %p224 = scmp.le.s32.totalorder 1, %s27
      %p225 = scmp.lt.s32.totalorder %s27, 3
      %p226 = pnand %p224, %p225
      %p227 = pneg %p226
      // Predicated region
      $region9: #{tpu_custom_call.1} parent=5 // pred_check
        _
      $region10: #{tpu_custom_call.1} parent=5 // pred_check_branch
        %229 = sbr.rel (%p226) target = $region12
      $region11: #{tpu_custom_call.1} parent=5 // pred_region
        %s230 = ssub.s32 %s27, 1
      $region12: #{tpu_custom_call.1} parent=5 // pred_fallthru
        _
      %p231 = scmp.lt.s32.totalorder %s27, 2
      // Predicated region
      $region13: #{tpu_custom_call.1} parent=5 // pred_check
        %p232 = pneg %p231
      $region14: #{tpu_custom_call.1} parent=5 // pred_check_branch
        %234 = sbr.rel (%p232) target = $region16
      $region15: #{tpu_custom_call.1} parent=5 // pred_region
        // Predicated region
        $region17: #{tpu_custom_call.1} parent=15 // pred_check
          %p235 = pneg %p68
        $region18: #{tpu_custom_call.1} parent=15 // pred_check_branch
          %237 = sbr.rel (%p235) target = $region20
        $region19: #{tpu_custom_call.1} parent=15 // pred_region
          %s238 = sand.u32 %s58, 1
          %s239 = scalar_lea.sflag [#allocation8], %s238
          %s240 = sand.u32 %s58, 1
          %s241 = smul.addr %s240, 8
          %s242 = scalar_lea.vmem [#allocation7], %s241
          %244 = vsyncadd %s239, 0
          %s245 = sadd.s32 %s35, %s34
          %s246 = smul.addr %s245, 8
          %s247 = scalar_lea.hbm %s0, %s246
          %s249 = sshll.u32 %s247, 4
          %s250 = int_to_ptr.hbm [resolvable:$true] %s249
          %s251 = sshll.u32 %s242, 4
          %s252 = int_to_ptr.vmem [resolvable:$true] %s251
          %254 = dma.hbm_to_vmem [thread:$0]  %s250, 128, %s252, %s239
        $region20: #{tpu_custom_call.1} parent=15 // pred_fallthru
          _
        // Predicated region
        $region21: #{tpu_custom_call.1} parent=15 // pred_check
          %p255 = pneg %p96
        $region22: #{tpu_custom_call.1} parent=15 // pred_check_branch
          %257 = sbr.rel (%p255) target = $region24
        $region23: #{tpu_custom_call.1} parent=15 // pred_region
          %s258 = sand.u32 %s27, 1
          %s259 = scalar_lea.sflag [#allocation11], %s258
          %s260 = sand.u32 %s86, 1
          %s261 = smul.addr %s260, 8
          %s262 = scalar_lea.vmem [#allocation10], %s261
          %264 = vsyncadd %s259, 0
          %s265 = sadd.s32 %s36, %s34
          %s266 = smul.addr %s265, 8
          %s267 = scalar_lea.hbm %s1, %s266
          %s269 = sshll.u32 %s267, 4
          %s270 = int_to_ptr.hbm [resolvable:$true] %s269
          %s271 = sshll.u32 %s262, 4
          %s272 = int_to_ptr.vmem [resolvable:$true] %s271
          %274 = dma.hbm_to_vmem [thread:$0]  %s270, 128, %s272, %s259
        $region24: #{tpu_custom_call.1} parent=15 // pred_fallthru
          _
        // Predicated region
        $region25: #{tpu_custom_call.1} parent=15 // pred_check
          %p275 = pneg %p124
        $region26: #{tpu_custom_call.1} parent=15 // pred_check_branch
          %277 = sbr.rel (%p275) target = $region28
        $region27: #{tpu_custom_call.1} parent=15 // pred_region
          %s278 = sand.u32 %s27, 1
          %s279 = scalar_lea.sflag [#allocation11], %s278
          %s280 = sand.u32 %s114, 1
          %s281 = smul.addr %s280, 8
          %s282 = scalar_lea.vmem [#allocation12], %s281
          %284 = vsyncadd %s279, 0
          %s285 = sadd.s32 %s36, %s34
          %s286 = smul.addr %s285, 8
          %s287 = scalar_lea.hbm %s2, %s286
          %s289 = sshll.u32 %s287, 4
          %s290 = int_to_ptr.hbm [resolvable:$true] %s289
          %s291 = sshll.u32 %s282, 4
          %s292 = int_to_ptr.vmem [resolvable:$true] %s291
          %294 = dma.hbm_to_vmem [thread:$0]  %s290, 128, %s292, %s279
        $region28: #{tpu_custom_call.1} parent=15 // pred_fallthru
          _
        // Predicated region
        $region29: #{tpu_custom_call.1} parent=15 // pred_check
          %p295 = pneg %p154
        $region30: #{tpu_custom_call.1} parent=15 // pred_check_branch
          %297 = sbr.rel (%p295) target = $region32
        $region31: #{tpu_custom_call.1} parent=15 // pred_region
          %s298 = sand.u32 %s144, 1
          %s299 = scalar_lea.sflag [#allocation14], %s298
          %s300 = sand.u32 %s144, 1
          %s301 = smul.addr %s300, 8
          %s302 = scalar_lea.vmem [#allocation13], %s301
          %304 = vsyncadd %s299, 0
          %s305 = sadd.s32 %s36, %s35
          %s306 = sadd.s32 %s305, %s34
          %s307 = smul.addr %s306, 8
          %s308 = scalar_lea.hbm %s3, %s307
          %s310 = sshll.u32 %s308, 4
          %s311 = int_to_ptr.hbm [resolvable:$true] %s310
          %s312 = sshll.u32 %s302, 4
          %s313 = int_to_ptr.vmem [resolvable:$true] %s312
          %315 = dma.hbm_to_vmem [thread:$0]  %s311, 128, %s313, %s299
        $region32: #{tpu_custom_call.1} parent=15 // pred_fallthru
          _
      $region16: #{tpu_custom_call.1} parent=5 // pred_fallthru
        _
      %p316 = scmp.le.s32.totalorder 1, %s27
      %p317 = scmp.lt.s32.totalorder %s27, 3
      %p318 = pnand %p316, %p317
      %p319 = pneg %p318
      // Predicated region
      $region33: #{tpu_custom_call.1} parent=5 // pred_check
        _
      $region34: #{tpu_custom_call.1} parent=5 // pred_check_branch
        %321 = sbr.rel (%p318) target = $region36
      $region35: #{tpu_custom_call.1} parent=5 // pred_region
        %s322 = ssub.s32 %s27, 1
        %s323 = sand.u32 %s61, 1
        %s324 = scalar_lea.sflag [#allocation8], %s323
        %s325 = sand.u32 %s61, 1
        %s326 = smul.addr %s325, 8
        %s327 = scalar_lea.vmem [#allocation7], %s326
        // Predicated region
        $region37: #{tpu_custom_call.1} parent=35 // pred_check
          %p328 = pneg %p74
        $region38: #{tpu_custom_call.1} parent=35 // pred_check_branch
          %330 = sbr.rel (%p328) target = $region40
        $region39: #{tpu_custom_call.1} parent=35 // pred_region
          %332 = dma.done %s324, 128
        $region40: #{tpu_custom_call.1} parent=35 // pred_fallthru
          _
        %s333 = sand.u32 %s32, 1
        %s334 = scalar_lea.sflag [#allocation11], %s333
        %s335 = sand.u32 %s89, 1
        %s336 = smul.addr %s335, 8
        %s337 = scalar_lea.vmem [#allocation10], %s336
        // Predicated region
        $region41: #{tpu_custom_call.1} parent=35 // pred_check
          %p338 = pneg %p102
        $region42: #{tpu_custom_call.1} parent=35 // pred_check_branch
          %340 = sbr.rel (%p338) target = $region44
        $region43: #{tpu_custom_call.1} parent=35 // pred_region
          %342 = dma.done %s334, 128
        $region44: #{tpu_custom_call.1} parent=35 // pred_fallthru
          _
        %s343 = sand.u32 %s32, 1
        %s344 = scalar_lea.sflag [#allocation11], %s343
        %s345 = sand.u32 %s117, 1
        %s346 = smul.addr %s345, 8
        %s347 = scalar_lea.vmem [#allocation12], %s346
        // Predicated region
        $region45: #{tpu_custom_call.1} parent=35 // pred_check
          %p348 = pneg %p130
        $region46: #{tpu_custom_call.1} parent=35 // pred_check_branch
          %350 = sbr.rel (%p348) target = $region48
        $region47: #{tpu_custom_call.1} parent=35 // pred_region
          %352 = dma.done %s344, 128
        $region48: #{tpu_custom_call.1} parent=35 // pred_fallthru
          _
        %s353 = sand.u32 %s147, 1
        %s354 = scalar_lea.sflag [#allocation14], %s353
        %s355 = sand.u32 %s147, 1
        %s356 = smul.addr %s355, 8
        %s357 = scalar_lea.vmem [#allocation13], %s356
        // Predicated region
        $region49: #{tpu_custom_call.1} parent=35 // pred_check
          %p358 = pneg %p160
        $region50: #{tpu_custom_call.1} parent=35 // pred_check_branch
          %360 = sbr.rel (%p358) target = $region52
        $region51: #{tpu_custom_call.1} parent=35 // pred_region
          %362 = dma.done %s354, 128
        $region52: #{tpu_custom_call.1} parent=35 // pred_fallthru
          _
        %s363 = sand.u32 %s61, 1
        %s364 = scalar_lea.sflag [#allocation8], %s363
        %s365 = sand.u32 %s61, 1
        %s366 = smul.addr %s365, 8
        %s367 = scalar_lea.vmem [#allocation7], %s366
        %p368 = pneg %p74
        %p369 = pneg %p71
        %s370 = sand.u32 %s32, 1
        %s371 = scalar_lea.sflag [#allocation11], %s370
        %s372 = sand.u32 %s89, 1
        %s373 = smul.addr %s372, 8
        %s374 = scalar_lea.vmem [#allocation10], %s373
        %p375 = pneg %p102
        %p376 = pneg %p99
        %s377 = sand.u32 %s32, 1
        %s378 = scalar_lea.sflag [#allocation11], %s377
        %s379 = sand.u32 %s117, 1
        %s380 = smul.addr %s379, 8
        %s381 = scalar_lea.vmem [#allocation12], %s380
        %p382 = pneg %p130
        %p383 = pneg %p127
        %s384 = sand.u32 %s147, 1
        %s385 = scalar_lea.sflag [#allocation14], %s384
        %s386 = sand.u32 %s147, 1
        %s387 = smul.addr %s386, 8
        %s388 = scalar_lea.vmem [#allocation13], %s387
        %p389 = pneg %p160
        %p390 = pneg %p157
        %p391 = pneg %p188
        %p392 = pneg %p185
        %s393 = sand.u32 %s175, 1
        %s394 = scalar_lea.sflag [#allocation9], %s393
        %s395 = sand.u32 %s175, 1
        %s396 = smul.addr %s395, 8
        %s397 = scalar_lea.vmem [#allocation15], %s396
        %p398 = pneg %p216
        %p399 = pneg %p213
        %s400 = sand.u32 %s203, 1
        %s401 = scalar_lea.sflag [#allocation17], %s400
        %s402 = sand.u32 %s203, 1
        %s403 = smul.addr %s402, 8
        %s404 = scalar_lea.vmem [#allocation16], %s403
        %p405 = scmp.eq.s32.totalorder %s39, 0
        // Predicated region
        $region53: #{tpu_custom_call.1} parent=35 // pred_check
          %p406 = pneg %p405
        $region54: #{tpu_custom_call.1} parent=35 // pred_check_branch
          %408 = sbr.rel (%p406) target = $region56
        $region55: #{tpu_custom_call.1} parent=35 // pred_region
          %v409 = vld [vmem:[%s327] sm:$0xff]
          %v410 = vmul.f32 %v409, 0.17677669
          %vm411 = vcmask 261120
          %412 = vst.msk [vmem:[#allocation2] sm:$0xff] %vm411, %v410
          %vm413 = vcmask 7168
          %414 = vst.msk [vmem:[#allocation3] sm:$0xff] %vm413, -inf
          %415 = vst.msk [vmem:[#allocation4] sm:$0xff] %vm413, 0.0
          %416 = vst.msk [vmem:[#allocation5] sm:$0xff] %vm411, 0.0
        $region56: #{tpu_custom_call.1} parent=35 // pred_fallthru
          _
        %v417 = vld [vmem:[#allocation2] sm:$0xff]
        %v418 = vld [vmem:[%s337] sm:$0xff]
        %vm419 = vcmask 261120
        %v421 = vsel %vm419, %v417, 0
        %v424 = vsel %vm419, %v418, 0
        %426 = vmatpush.xpose.msra.mxu0 0.0
        %427 = vmatpush.xpose.msra.mxu0 0.0
        %428 = vmatpush.xpose.msra.mxu0 0.0
        %429 = vmatpush.xpose.msra.mxu0 0.0
        %430 = vmatpush.xpose.msra.mxu0 0.0
        %431 = vmatpush.xpose.msra.mxu0 0.0
        %432 = vmatpush.xpose.msra.mxu0 0.0
        %433 = vmatpush.xpose.msra.mxu0 0.0
        %434 = vmatpush.xpose.msra.mxu0 0.0
        %435 = vmatpush.xpose.msra.mxu0 0.0
        %436 = vmatpush.xpose.msra.mxu0 0.0
        %437 = vmatpush.xpose.msra.mxu0 0.0
        %438 = vmatpush.xpose.msra.mxu0 0.0
        %439 = vmatpush.xpose.msra.mxu0 0.0
        %440 = vmatpush.xpose.msra.mxu0 0.0
        %441 = vmatpush.xpose.msra.mxu0 %v424
        %442 = vmatmul.f32.gmra.mxu0 %v421
        %v443 = vpop.f32.mrf.mxu0
        %v444 = vadd.f32 0.0, %v443
        %445 = vdwg.mxu0
        %v446 = vld [vmem:[%s357] sm:$0xff]
        %vm447 = vcmp.ne.f32.partialorder %v446, 0.0
        %v448 = vsel %vm447, %v444, -1e+09
        %v449 = vld [vmem:[#allocation3] sm:$0xff]
        %vm450 = vcmask 64512
        %v451 = vsel %vm450, %v448, -inf
        %452 = vmax.xlane.f32.xlu0 %v451
        %v453 = vpop.xlane.xlu0 %452
        %v454 = vmax.f32 %v449, %v453
        %v455 = vsub.f32 %v449, %v454
        %v456 = vmul.f32 %v455, 1.442695
        %v457 = vpow.pop %v456
        %459 = vset.pattern.permute.xlu0 0
        %460 = vperm.xlu0 %459, %v454
        %v461 = vpop.permute.xlu0 %460
        %v463 = vsub.f32 %v448, %v461
        %v464 = vmul.f32 %v463, 1.442695
        %v465 = vpow.pop %v464
        %v466 = vld [vmem:[#allocation4] sm:$0xff]
        %v467 = vmul.f32 %v457, %v466
        %v468 = vsel %vm450, %v465, 0.0
        %469 = vadd.xlane.f32.xlu0 %v468
        %v470 = vpop.xlane.xlu0 %469
        %v471 = vadd.f32 %v467, %v470
        %vm472 = vcmask 7168
        %473 = vst.msk [vmem:[#allocation4] sm:$0xff] %vm472, %v471
        %v474 = vld [vmem:[#allocation5] sm:$0xff]
        %476 = vset.pattern.permute.xlu0 0
        %477 = vperm.xlu0 %476, %v457
        %v478 = vpop.permute.xlu0 %477
        %v480 = vmul.f32 %v478, %v474
        %v481 = vld [vmem:[%s347] sm:$0xff]
        %v483 = vsel %vm450, %v465, 0
        %485 = vmatpush.msra.mxu0 0.0
        %486 = vmatpush.msra.mxu0 0.0
        %487 = vmatpush.msra.mxu0 0.0
        %488 = vmatpush.msra.mxu0 0.0
        %489 = vmatpush.msra.mxu0 0.0
        %490 = vmatpush.msra.mxu0 0.0
        %491 = vmatpush.msra.mxu0 0.0
        %492 = vmatpush.msra.mxu0 0.0
        %493 = vmatpush.msra.mxu0 0.0
        %494 = vmatpush.msra.mxu0 0.0
        %495 = vmatpush.msra.mxu0 0.0
        %496 = vmatpush.msra.mxu0 0.0
        %497 = vmatpush.msra.mxu0 0.0
        %498 = vmatpush.msra.mxu0 0.0
        %499 = vmatpush.msra.mxu0 0.0
        %500 = vmatpush.msra.mxu0 %v481
        %501 = vmatmul.f32.gmra.mxu0 %v483
        %v502 = vpop.f32.mrf.mxu0
        %v503 = vadd.f32 0.0, %v502
        %504 = vdwg.mxu0
        %v505 = vadd.f32 %v480, %v503
        %506 = vst.msk [vmem:[#allocation5] sm:$0xff] %vm419, %v505
        %507 = vst.msk [vmem:[#allocation3] sm:$0xff] %vm472, %v454
        %s508 = smul.u32 %s39, 8
        %s509 = scalar_lea.vmem [#allocation6], %s508
        %510 = vst.msk [vmem:[%s509] sm:$0xff] %vm472, %v454
        %511 = vst.msk [vmem:[%s404] sm:$0xff] %vm450, %v465
        // Predicated region
        $region57: #{tpu_custom_call.1} parent=35 // pred_check
          %p512 = pneg %p405
        $region58: #{tpu_custom_call.1} parent=35 // pred_check_branch
          %514 = sbr.rel (%p512) target = $region60
        $region59: #{tpu_custom_call.1} parent=35 // pred_region
          %v515 = vld [vmem:[#allocation4] sm:$0xff]
          %v516 = vrcp.pop %v515
          %v517 = vmul.f32 %v515, %v516
          %v518 = vsub.f32 1.0, %v517
          %v519 = vmul.f32 %v516, %v518
          %v520 = vadd.f32 %v516, %v519
          %vm521 = vweird.f32 %v515
          %vm522 = vweird.f32 %v516
          %vm523 = vmor %vm521, %vm522
          %v524 = vsel %vm523, %v516, %v520
          %v525 = vand.u32 2147483647, %v515
          %vm526 = vcmp.eq.f32.partialorder %v525, 8.507059e+37
          %v527 = vand.u32 %v515, 2147483648
          %v528 = vor.u32 1.1754944e-38, %v527
          %v529 = vsel %vm526, %v528, %v524
          %v530 = vmul.f32 1.0, %v529
          %v531 = vld [vmem:[#allocation5] sm:$0xff]
          %533 = vset.pattern.permute.xlu0 0
          %534 = vperm.xlu0 %533, %v530
          %v535 = vpop.permute.xlu0 %534
          %v537 = vmul.f32 %v531, %v535
          %538 = vst.msk [vmem:[%s397] sm:$0xff] %vm419, %v537
          %v539 = vld [vmem:[#allocation3] sm:$0xff]
          %v540 = vld [vmem:[#allocation6] sm:$0xff]
          %v541 = vsub.f32 %v540, %v539
          %v542 = vmul.f32 %v541, 1.442695
          %v543 = vpow.pop %v542
          %v544 = vmul.f32 %v543, %v530
          %v545 = vld [vmem:[%s404] sm:$0xff]
          %547 = vset.pattern.permute.xlu0 0
          %548 = vperm.xlu0 %547, %v544
          %v549 = vpop.permute.xlu0 %548
          %v551 = vmul.f32 %v545, %v549
          %552 = vst.msk [vmem:[%s404] sm:$0xff] %vm450, %v551
        $region60: #{tpu_custom_call.1} parent=35 // pred_fallthru
          _
        %s553 = sand.u32 %s175, 1
        %s554 = scalar_lea.sflag [#allocation9], %s553
        %s555 = sand.u32 %s175, 1
        %s556 = smul.addr %s555, 8
        %s557 = scalar_lea.vmem [#allocation15], %s556
        %s558 = sand.u32 %s203, 1
        %s559 = scalar_lea.sflag [#allocation17], %s558
        %s560 = sand.u32 %s203, 1
        %s561 = smul.addr %s560, 8
        %s562 = scalar_lea.vmem [#allocation16], %s561
        // Predicated region
        $region61: #{tpu_custom_call.1} parent=35 // pred_check
          %p563 = pneg %p185
        $region62: #{tpu_custom_call.1} parent=35 // pred_check_branch
          %565 = sbr.rel (%p563) target = $region64
        $region63: #{tpu_custom_call.1} parent=35 // pred_region
          %567 = vsyncadd %s554, 0
          %s568 = sadd.s32 %s38, %s37
          %s569 = smul.addr %s568, 8
          %s570 = scalar_lea.hbm %s4, %s569
          %s572 = sshll.u32 %s557, 4
          %s573 = int_to_ptr.vmem [resolvable:$true] %s572
          %s574 = sshll.u32 %s570, 4
          %s575 = int_to_ptr.hbm [resolvable:$true] %s574
          %577 = dma.vmem_to_hbm [thread:$0]  %s573, 128, %s575, %s554
        $region64: #{tpu_custom_call.1} parent=35 // pred_fallthru
          _
        // Predicated region
        $region65: #{tpu_custom_call.1} parent=35 // pred_check
          %p578 = pneg %p213
        $region66: #{tpu_custom_call.1} parent=35 // pred_check_branch
          %580 = sbr.rel (%p578) target = $region68
        $region67: #{tpu_custom_call.1} parent=35 // pred_region
          %582 = vsyncadd %s559, 0
          %s583 = sadd.s32 %s38, %s37
          %s584 = smul.addr %s583, 8
          %s585 = scalar_lea.hbm %s5, %s584
          %s587 = sshll.u32 %s562, 4
          %s588 = int_to_ptr.vmem [resolvable:$true] %s587
          %s589 = sshll.u32 %s585, 4
          %s590 = int_to_ptr.hbm [resolvable:$true] %s589
          %592 = dma.vmem_to_hbm [thread:$0]  %s588, 128, %s590, %s559
        $region68: #{tpu_custom_call.1} parent=35 // pred_fallthru
          _
      $region36: #{tpu_custom_call.1} parent=5 // pred_fallthru
        _
      %p593 = scmp.le.s32.totalorder 2, %s27
      // Predicated region
      $region69: #{tpu_custom_call.1} parent=5 // pred_check
        %p594 = pneg %p593
      $region70: #{tpu_custom_call.1} parent=5 // pred_check_branch
        %596 = sbr.rel (%p594) target = $region72
      $region71: #{tpu_custom_call.1} parent=5 // pred_region
        %s597 = ssub.s32 %s27, 2
        // Predicated region
        $region73: #{tpu_custom_call.1} parent=71 // pred_check
          %p598 = pneg %p191
        $region74: #{tpu_custom_call.1} parent=71 // pred_check_branch
          %600 = sbr.rel (%p598) target = $region76
        $region75: #{tpu_custom_call.1} parent=71 // pred_region
          %s601 = sand.u32 %s176, 1
          %s602 = scalar_lea.sflag [#allocation9], %s601
          %s603 = sand.u32 %s176, 1
          %s604 = smul.addr %s603, 8
          %s605 = scalar_lea.vmem [#allocation15], %s604
          %607 = dma.done %s602, 128
        $region76: #{tpu_custom_call.1} parent=71 // pred_fallthru
          _
        // Predicated region
        $region77: #{tpu_custom_call.1} parent=71 // pred_check
          %p608 = pneg %p219
        $region78: #{tpu_custom_call.1} parent=71 // pred_check_branch
          %610 = sbr.rel (%p608) target = $region80
        $region79: #{tpu_custom_call.1} parent=71 // pred_region
          %s611 = sand.u32 %s204, 1
          %s612 = scalar_lea.sflag [#allocation17], %s611
          %s613 = sand.u32 %s204, 1
          %s614 = smul.addr %s613, 8
          %s615 = scalar_lea.vmem [#allocation16], %s614
          %617 = dma.done %s612, 128
        $region80: #{tpu_custom_call.1} parent=71 // pred_fallthru
          _
      $region72: #{tpu_custom_call.1} parent=5 // pred_fallthru
        _
    $region6: #{tpu_custom_call.1} parent=1 // loop_footer
      %s31 = sadd.s32 1, %s27
    $region7: #{tpu_custom_call.1} parent=1 // loop_footer_branch
      %26 = sbr.rel target = $region3
    $region8: #{tpu_custom_call.1} parent=1 // loop_exit
      _
    %618 = vsyncpa [#allocation8], 1
    %s619 = scalar_lea.sflag [#allocation8], 1
    %620 = vsyncpa %s619, 1
    %621 = vsyncpa [#allocation11], 1
    %s622 = scalar_lea.sflag [#allocation11], 1
    %623 = vsyncpa %s622, 1
    %624 = vsyncpa [#allocation14], 1
    %s625 = scalar_lea.sflag [#allocation14], 1
    %626 = vsyncpa %s625, 1
    %627 = vsyncpa [#allocation9], 1
    %s628 = scalar_lea.sflag [#allocation9], 1
    %629 = vsyncpa %s628, 1
    %630 = vsyncpa [#allocation17], 1
    %s631 = scalar_lea.sflag [#allocation17], 1
    %632 = vsyncpa %s631, 1

</llo_original>
